<compile_context>
chip_gen: v5e
topology: v5e:2x2
jax: 0.10.0
libtpu: 0.0.40
codegen_flags: <defaults>
</compile_context>

<pallas_src>
import jax
import jax.numpy as jnp
from jax.experimental import pallas as pl
from jax.experimental.pallas import tpu as pltpu


# ----------------------------------------------------------------------------
# Kernel
# ----------------------------------------------------------------------------
def _make_kernel(H, W, Cout, groups, eps, upsample):
    cs = Cout // groups
    inv_cnt = 1.0 / float(H * W * cs)

    def kernel(*refs):
        if upsample:
            (p_ref, w_ref, g_ref, b_ref, gat_ref, sca_ref, aw_ref, out_ref) = refs
        else:
            (p_ref, w_ref, g_ref, b_ref, gat_ref, sca_ref, out_ref) = refs

        # --- conv3x3 as ONE im2col matmul: (W*H, 9*Cin) x (9*Cin, Cout) -----
        # bf16 operands, f32 accumulation on the MXU.  Rows are W-major.
        acc = jnp.dot(p_ref[0], w_ref[...],
                      preferred_element_type=jnp.float32)              # (W*H, Cout) f32

        # --- GroupNorm(groups, Cout): single-pass stats, biased variance ----
        s1 = jnp.sum(acc, axis=0, keepdims=True)                       # (1, Cout)
        s2 = jnp.sum(acc * acc, axis=0, keepdims=True)                 # (1, Cout)
        stats = jnp.concatenate([s1, s2], axis=0)                      # (2, Cout)
        gstats = jnp.dot(stats, gat_ref[...],
                         preferred_element_type=jnp.float32) * inv_cnt  # (2, G)
        gmean = gstats[0:1]                                             # (1, G)  E[x]
        gvar = gstats[1:2] - gmean * gmean                              # (1, G)  E[x^2]-E[x]^2
        inv_g = jax.lax.rsqrt(gvar + eps)                               # (1, G)
        packed = jnp.concatenate([gmean, inv_g], axis=0)                # (2, G)
        packed_c = jnp.dot(packed, sca_ref[...],
                           preferred_element_type=jnp.float32)          # (2, Cout)
        scale_c = packed_c[1:2] * g_ref[...]                            # inv * gamma
        shift_c = b_ref[...] - packed_c[0:1] * scale_c                  # beta - mean*scale

        # fused normalize + affine + ReLU: one pass over acc
        z = jnp.maximum(acc * scale_c + shift_c, 0.0)                   # (W*H, Cout)

        if upsample:
            # W-axis stage of the separable bilinear x2 (align_corners=True):
            # rows are W-major, so (W*H, Cout) -> (W, H*Cout) is contiguous and
            # the stage is one wide MXU matmul (N = H*Cout lanes).
            z2 = z.reshape(W, H * Cout).astype(jnp.bfloat16)
            t = jnp.dot(aw_ref[...], z2,
                        preferred_element_type=jnp.float32)             # (2W, H*Cout)
            out_ref[0] = t.astype(out_ref.dtype)                        # lane-dense store
        else:
            out_ref[0] = z.astype(out_ref.dtype)                        # lane dim = Cout

    return kernel


# ----------------------------------------------------------------------------
# Glue
# ----------------------------------------------------------------------------
def _bilinear_matrix(size, scale=2):
    """Interp matrix A (scale*size, size): out = A @ in, align_corners=True."""
    out_size = size * scale
    if size == 1:  # degenerate case: everything maps to the single source row
        return jnp.ones((out_size, 1), jnp.float32)
    src = jnp.arange(out_size, dtype=jnp.float32) * (size - 1) / (out_size - 1)
    i0 = jnp.clip(jnp.floor(src).astype(jnp.int32), 0, size - 2)
    frac = src - i0.astype(jnp.float32)
    rows = jnp.arange(out_size)
    A = jnp.zeros((out_size, size), jnp.float32)
    A = A.at[rows, i0].add(1.0 - frac)
    A = A.at[rows, i0 + 1].add(frac)
    return A


def conv3x3_gn_relu(x_nchw, weight_oihw, gamma, beta, *,
                    groups=32, eps=1e-5, upsample=False):
    """Conv2d(3x3,s1,p1,no bias) -> GroupNorm(groups,Cout) -> ReLU [-> bilinear x2].

    NCHW in, NCHW out (PyTorch semantics).  Cout should be a multiple of 128
    (typical A2FPN widths) so output stores are lane-dense.
    """
    x_nchw = x_nchw.astype(jnp.float32)
    N, Cin, H, W = x_nchw.shape
    Cout = weight_oihw.shape[0]
    assert Cout % groups == 0
    cs = Cout // groups

    # ---- wrapper-side prep (all small at Cin=4; XLA fuses these) ----------
    # W-major spatial layout (NWHC), so kernel rows are (w*H + h).
    x_nwhc = jnp.transpose(x_nchw, (0, 3, 2, 1))                # (N, W, H, Cin)
    xpad = jnp.pad(x_nwhc, ((0, 0), (1, 1), (1, 1), (0, 0)))
    # im2col patches, tap order (dy, dx, cin) -> (N, W*H, 9*Cin), bf16 for MXU.
    patches = jnp.concatenate(
        [xpad[:, dx:dx + W, dy:dy + H, :] for dy in range(3) for dx in range(3)],
        axis=-1).reshape(N, W * H, 9 * Cin).astype(jnp.bfloat16)
    # weights OIHW -> (dy, dx, cin, cout) -> (9*Cin, Cout), same tap order, bf16
    w_r = jnp.transpose(weight_oihw.astype(jnp.float32), (2, 3, 1, 0))
    w_r = w_r.reshape(9 * Cin, Cout).astype(jnp.bfloat16)
    g2 = gamma.astype(jnp.float32).reshape(1, Cout)
    b2 = beta.astype(jnp.float32).reshape(1, Cout)
    # hoisted GroupNorm group gather/scatter (channel c belongs to group c // cs)
    grp = jnp.arange(Cout, dtype=jnp.int32) // cs
    gather = (grp[:, None] == jnp.arange(groups, dtype=jnp.int32)[None, :]
              ).astype(jnp.float32)                             # (Cout, G)
    scatter = gather.T                                          # (G, Cout)

    inputs = [patches, w_r, g2, b2, gather, scatter]
    in_specs = [
        pl.BlockSpec((1, W * H, 9 * Cin), lambda n: (n, 0, 0)),
        pl.BlockSpec((9 * Cin, Cout), lambda n: (0, 0)),
        pl.BlockSpec((1, Cout), lambda n: (0, 0)),
        pl.BlockSpec((1, Cout), lambda n: (0, 0)),
        pl.BlockSpec((Cout, groups), lambda n: (0, 0)),
        pl.BlockSpec((groups, Cout), lambda n: (0, 0)),
    ]

    if upsample:
        a_w = _bilinear_matrix(W).astype(jnp.bfloat16)           # (2W, W) bf16 operand
        inputs.append(a_w)
        in_specs.append(pl.BlockSpec((2 * W, W), lambda n: (0, 0)))
        out_shape = jax.ShapeDtypeStruct((N, 2 * W, H * Cout), jnp.float32)
        out_spec = pl.BlockSpec((1, 2 * W, H * Cout), lambda n: (n, 0, 0))
    else:
        out_shape = jax.ShapeDtypeStruct((N, W * H, Cout), jnp.float32)
        out_spec = pl.BlockSpec((1, W * H, Cout), lambda n: (n, 0, 0))

    out = pl.pallas_call(
        _make_kernel(H, W, Cout, groups, eps, upsample),
        out_shape=out_shape,
        grid=(N,),
        in_specs=in_specs,
        out_specs=out_spec,
        compiler_params=pltpu.CompilerParams(
            dimension_semantics=("parallel",)),
    )(*inputs)

    if upsample:
        # H-axis stage of the separable bilinear upsample: one tiny (2H, H)
        # dense contraction, fused by XLA with the reshape/transpose to NCHW.
        out = out.reshape(N, 2 * W, H, Cout)                     # [n, p(=2W), h, c]
        a_h = _bilinear_matrix(H)                                # (2H, H) f32
        return jnp.einsum("qh,nphc->ncqp", a_h, out)             # (N, Cout, 2H, 2W)
    out = out.reshape(N, W, H, Cout)
    return jnp.transpose(out, (0, 3, 2, 1))                      # (N, Cout, H, W)


# ----------------------------------------------------------------------------
# Pure-JAX reference (for correctness check)
# ----------------------------------------------------------------------------
def reference(x, w, gamma, beta, *, groups=32, eps=1e-5, upsample=False):
    y = jax.lax.conv_general_dilated(
        x.astype(jnp.float32), w.astype(jnp.float32),
        window_strides=(1, 1), padding=((1, 1), (1, 1)),
        dimension_numbers=("NCHW", "OIHW", "NCHW"))
    N, C, H, W = y.shape
    yr = y.reshape(N, groups, -1)
    mean = yr.mean(-1, keepdims=True)
    var = ((yr - mean) ** 2).mean(-1, keepdims=True)
    yn = ((yr - mean) * jax.lax.rsqrt(var + eps)).reshape(N, C, H, W)
    z = jnp.maximum(yn * gamma[None, :, None, None] + beta[None, :, None, None], 0.0)
    if upsample:
        Ah = _bilinear_matrix(H)
        Aw = _bilinear_matrix(W)
        z = jnp.einsum("ph,qw,nchw->ncpq", Ah, Aw, z)
    return z


# ----------------------------------------------------------------------------
# Main
# ----------------------------------------------------------------------------
if __name__ == "__main__":
    key = jax.random.PRNGKey(0)
    k_x, k_w, k_g, k_b = jax.random.split(key, 4)

    N, Cin, H, W = 2, 4, 16, 16
    Cout = 128  # A2FPN-style width: multiple of 32 (GroupNorm) and of 128 (lane-dense)

    x = jax.random.normal(k_x, (N, Cin, H, W), jnp.float32)
    weight = jax.random.normal(k_w, (Cout, Cin, 3, 3), jnp.float32) * 0.1
    gamma = 1.0 + 0.1 * jax.random.normal(k_g, (Cout,), jnp.float32)
    beta = 0.1 * jax.random.normal(k_b, (Cout,), jnp.float32)

    ok = True
    for upsample in (False, True):
        out = conv3x3_gn_relu(x, weight, gamma, beta, upsample=upsample)
        out = jax.block_until_ready(out)
        ref = reference(x, weight, gamma, beta, upsample=upsample)
        # tolerance loosened vs. pure-f32 because conv / upsample matmul
        # operands are bf16 (f32 accumulation); GN stats stay in f32.
        if not jnp.allclose(out, ref, atol=5e-2, rtol=5e-2):
            ok = False
            print("MISMATCH (upsample=%s): max abs err %e" %
                  (upsample, float(jnp.max(jnp.abs(out - ref)))))

    if ok:
        print("KERNEL_OK")
</pallas_src>

<mosaic_0001>
module attributes {stable_mosaic.version = 11 : i64} {
  func.func @kernel(%arg0: i32, %arg1: memref<1x256x36xbf16, #tpu.memory_space<vmem>>, %arg2: memref<36x128xbf16, #tpu.memory_space<vmem>>, %arg3: memref<1x128xf32, #tpu.memory_space<vmem>>, %arg4: memref<1x128xf32, #tpu.memory_space<vmem>>, %arg5: memref<128x32xf32, #tpu.memory_space<vmem>>, %arg6: memref<32x128xf32, #tpu.memory_space<vmem>>, %arg7: memref<1x256x128xf32, #tpu.memory_space<vmem>>) attributes {dimension_semantics = [#tpu.dimension_semantics<parallel>], iteration_bounds = array<i64: 2>, scalar_prefetch = 0 : i64, scratch_operands = 0 : i64, tpu.core_type = #tpu.core_type<tc>, window_params = [{transform_indices = @transform_0, window_bounds = array<i64: 1, 256, 36>}, {pipeline_mode = #tpu.pipeline_mode<synchronous>, transform_indices = @transform_1, window_bounds = array<i64: 36, 128>}, {pipeline_mode = #tpu.pipeline_mode<synchronous>, transform_indices = @transform_2, window_bounds = array<i64: 1, 128>}, {pipeline_mode = #tpu.pipeline_mode<synchronous>, transform_indices = @transform_3, window_bounds = array<i64: 1, 128>}, {pipeline_mode = #tpu.pipeline_mode<synchronous>, transform_indices = @transform_4, window_bounds = array<i64: 128, 32>}, {pipeline_mode = #tpu.pipeline_mode<synchronous>, transform_indices = @transform_5, window_bounds = array<i64: 32, 128>}, {transform_indices = @transform_6, window_bounds = array<i64: 1, 256, 128>}]} {
    %c0 = arith.constant 0 : index
    %c0_0 = arith.constant 0 : index
    %c0_1 = arith.constant 0 : index
    %0 = vector.load %arg1[%c0, %c0_0, %c0_1] : memref<1x256x36xbf16, #tpu.memory_space<vmem>>, vector<1x256x36xbf16>
    %1 = vector.shape_cast %0 : vector<1x256x36xbf16> to vector<256x36xbf16>
    %c0_2 = arith.constant 0 : index
    %c0_3 = arith.constant 0 : index
    %2 = vector.load %arg2[%c0_2, %c0_3] : memref<36x128xbf16, #tpu.memory_space<vmem>>, vector<36x128xbf16>
    %cst = arith.constant dense<0.000000e+00> : vector<256x128xf32>
    %3 = tpu.matmul %1, %2, %cst {dimension_numbers = #tpu.dot_dimension_numbers<[1], [0], [0], [1], [0, 0, 1, 1], [], []>} : vector<256x36xbf16>, vector<36x128xbf16>, vector<256x128xf32> -> vector<256x128xf32>
    %cst_4 = arith.constant dense<0.000000e+00> : vector<128xf32>
    %4 = vector.multi_reduction <add>, %3, %cst_4 [0] : vector<256x128xf32> to vector<128xf32>
    %5 = vector.shape_cast %4 : vector<128xf32> to vector<1x128xf32>
    %6 = arith.mulf %3, %3 : vector<256x128xf32>
    %cst_5 = arith.constant dense<0.000000e+00> : vector<128xf32>
    %7 = vector.multi_reduction <add>, %6, %cst_5 [0] : vector<256x128xf32> to vector<128xf32>
    %8 = vector.shape_cast %7 : vector<128xf32> to vector<1x128xf32>
    %9 = tpu.concatenate %5, %8 in 0 : vector<1x128xf32>, vector<1x128xf32> -> vector<2x128xf32>
    %c0_6 = arith.constant 0 : index
    %c0_7 = arith.constant 0 : index
    %10 = vector.load %arg5[%c0_6, %c0_7] : memref<128x32xf32, #tpu.memory_space<vmem>>, vector<128x32xf32>
    %cst_8 = arith.constant dense<0.000000e+00> : vector<2x32xf32>
    %11 = tpu.matmul %9, %10, %cst_8 {dimension_numbers = #tpu.dot_dimension_numbers<[1], [0], [0], [1], [0, 0, 1, 1], [], []>} : vector<2x128xf32>, vector<128x32xf32>, vector<2x32xf32> -> vector<2x32xf32>
    %cst_9 = arith.constant 9.765625E-4 : f32
    %12 = vector.broadcast %cst_9 : f32 to vector<2x32xf32>
    %13 = arith.mulf %11, %12 : vector<2x32xf32>
    %14 = vector.extract_strided_slice %13 {offsets = [0, 0], sizes = [1, 32], strides = [1, 1]} : vector<2x32xf32> to vector<1x32xf32>
    %15 = vector.extract_strided_slice %13 {offsets = [1, 0], sizes = [1, 32], strides = [1, 1]} : vector<2x32xf32> to vector<1x32xf32>
    %16 = arith.mulf %14, %14 : vector<1x32xf32>
    %17 = arith.subf %15, %16 : vector<1x32xf32>
    %cst_10 = arith.constant 9.99999974E-6 : f32
    %18 = vector.broadcast %cst_10 : f32 to vector<1x32xf32>
    %19 = arith.addf %17, %18 : vector<1x32xf32>
    %20 = math.rsqrt %19 : vector<1x32xf32>
    %21 = tpu.concatenate %14, %20 in 0 : vector<1x32xf32>, vector<1x32xf32> -> vector<2x32xf32>
    %c0_11 = arith.constant 0 : index
    %c0_12 = arith.constant 0 : index
    %22 = vector.load %arg6[%c0_11, %c0_12] : memref<32x128xf32, #tpu.memory_space<vmem>>, vector<32x128xf32>
    %cst_13 = arith.constant dense<0.000000e+00> : vector<2x128xf32>
    %23 = tpu.matmul %21, %22, %cst_13 {dimension_numbers = #tpu.dot_dimension_numbers<[1], [0], [0], [1], [0, 0, 1, 1], [], []>} : vector<2x32xf32>, vector<32x128xf32>, vector<2x128xf32> -> vector<2x128xf32>
    %24 = vector.extract_strided_slice %23 {offsets = [1, 0], sizes = [1, 128], strides = [1, 1]} : vector<2x128xf32> to vector<1x128xf32>
    %c0_14 = arith.constant 0 : index
    %c0_15 = arith.constant 0 : index
    %25 = vector.load %arg3[%c0_14, %c0_15] : memref<1x128xf32, #tpu.memory_space<vmem>>, vector<1x128xf32>
    %26 = arith.mulf %24, %25 : vector<1x128xf32>
    %c0_16 = arith.constant 0 : index
    %c0_17 = arith.constant 0 : index
    %27 = vector.load %arg4[%c0_16, %c0_17] : memref<1x128xf32, #tpu.memory_space<vmem>>, vector<1x128xf32>
    %28 = vector.extract_strided_slice %23 {offsets = [0, 0], sizes = [1, 128], strides = [1, 1]} : vector<2x128xf32> to vector<1x128xf32>
    %29 = arith.mulf %28, %26 : vector<1x128xf32>
    %30 = arith.subf %27, %29 : vector<1x128xf32>
    %31 = vector.broadcast %26 : vector<1x128xf32> to vector<256x128xf32>
    %32 = arith.mulf %3, %31 : vector<256x128xf32>
    %33 = vector.broadcast %30 : vector<1x128xf32> to vector<256x128xf32>
    %34 = arith.addf %32, %33 : vector<256x128xf32>
    %cst_18 = arith.constant 0.000000e+00 : f32
    %35 = vector.broadcast %cst_18 : f32 to vector<256x128xf32>
    %36 = arith.maximumf %34, %35 : vector<256x128xf32>
    %c0_19 = arith.constant 0 : index
    %c0_20 = arith.constant 0 : index
    %c0_21 = arith.constant 0 : index
    %37 = vector.load %arg7[%c0_19, %c0_20, %c0_21] : memref<1x256x128xf32, #tpu.memory_space<vmem>>, vector<1x256x128xf32>
    %38 = vector.shape_cast %37 : vector<1x256x128xf32> to vector<256x128xf32>
    %39 = vector.shape_cast %36 : vector<256x128xf32> to vector<1x256x128xf32>
    tpu.vector_store %arg7[%c0_19, %c0_20, %c0_21], %39 {strides = array<i32>} : memref<1x256x128xf32, #tpu.memory_space<vmem>>, vector<1x256x128xf32>,
    return
  }
  func.func @transform_0(%arg0: i32) -> (i32, i32, i32) {
    %c0_i32 = arith.constant 0 : i32
    %c0_i32_0 = arith.constant 0 : i32
    %c0_i32_1 = arith.constant 0 : i32
    return %arg0, %c0_i32, %c0_i32_0 : i32, i32, i32
  }
  func.func @transform_1(%arg0: i32) -> (i32, i32) {
    %c0_i32 = arith.constant 0 : i32
    %c0_i32_0 = arith.constant 0 : i32
    %c0_i32_1 = arith.constant 0 : i32
    return %c0_i32, %c0_i32_0 : i32, i32
  }
  func.func @transform_2(%arg0: i32) -> (i32, i32) {
    %c0_i32 = arith.constant 0 : i32
    %c0_i32_0 = arith.constant 0 : i32
    %c0_i32_1 = arith.constant 0 : i32
    return %c0_i32, %c0_i32_0 : i32, i32
  }
  func.func @transform_3(%arg0: i32) -> (i32, i32) {
    %c0_i32 = arith.constant 0 : i32
    %c0_i32_0 = arith.constant 0 : i32
    %c0_i32_1 = arith.constant 0 : i32
    return %c0_i32, %c0_i32_0 : i32, i32
  }
  func.func @transform_4(%arg0: i32) -> (i32, i32) {
    %c0_i32 = arith.constant 0 : i32
    %c0_i32_0 = arith.constant 0 : i32
    %c0_i32_1 = arith.constant 0 : i32
    return %c0_i32, %c0_i32_0 : i32, i32
  }
  func.func @transform_5(%arg0: i32) -> (i32, i32) {
    %c0_i32 = arith.constant 0 : i32
    %c0_i32_0 = arith.constant 0 : i32
    %c0_i32_1 = arith.constant 0 : i32
    return %c0_i32, %c0_i32_0 : i32, i32
  }
  func.func @transform_6(%arg0: i32) -> (i32, i32, i32) {
    %c0_i32 = arith.constant 0 : i32
    %c0_i32_0 = arith.constant 0 : i32
    %c0_i32_1 = arith.constant 0 : i32
    return %arg0, %c0_i32, %c0_i32_0 : i32, i32, i32
  }
}

</mosaic_0001>

<llo_original>
// kernel: tpu_custom_call.1
$region0: #{tpu_custom_call.1}
  #allocation0 [shape = 'u32[]', space=smem, size = 0x4, offset = 0x4, fixed_abs, tag = 'smem constant byte address 0x4 - core index']
  #allocation1 [shape = 'u32[72,128]{1,0:T(1,128)}', space=vmem, size = 0x9000, scoped, tag = 'internal scratch']
  %s0 = inlined_call_operand.vmem [shape: bf16[2,256,36], index: 0, kind: input, shape index: {}]
  %s1 = inlined_call_operand.vmem [shape: bf16[36,128], index: 1, kind: input, shape index: {}]
  %s2 = inlined_call_operand.vmem [shape: f32[1,128], index: 2, kind: input, shape index: {}]
  %s3 = inlined_call_operand.vmem [shape: f32[1,128], index: 3, kind: input, shape index: {}]
  %s4 = inlined_call_operand.vmem [shape: f32[128,32], index: 4, kind: input, shape index: {}]
  %s5 = inlined_call_operand.vmem [shape: f32[32,128], index: 5, kind: input, shape index: {}]
  %s6 = inlined_call_operand.hbm [shape: f32[2,256,128], index: 6, kind: output, shape index: {}]
  %s7 = sld [smem:[#allocation0]]
  $region57: #{tpu_custom_call.1} parent=0
    _
  %s9 = ssub.s32 1, %s7
  %s10 = scalar_select 0, %s9, %s7
  $region1: #{tpu_custom_call.1} parent=0
    #allocation2 [shape = 'u8[262144]{0}', space=vmem, size = 0x40000, scoped, tag = 'output window, operand 0']
    #allocation3 [shape = 's32[2]{0}', space=sflag, size = 0x8, scoped, tag = 'scoped memory for tpu_custom_call.1']
    %11 = vsyncpa [#allocation3], 0
    %s12 = scalar_lea.sflag [#allocation3], 1
    %13 = vsyncpa %s12, 0
    loop: start=0, step=1, limit=4
    $region2: #{tpu_custom_call.1} parent=1 // loop_pre_header
      _
    $region3: #{tpu_custom_call.1} parent=1 // loop_header
      %s15 = sphi 0, %s19
      %p16 = scmp.ge.s32.totalorder %s15, 4
      %s25 = sphi 0, %s27
      %s28 = sphi 0, %s25
      %s29 = sphi 0, %s28
      %s45 = sphi 0, %s29
      %s49 = sphi 0, %s49
      %s51 = sphi 0, %s49
      %s52 = sphi 0, %s51
      %s66 = sphi 0, %s52
      %s70 = sphi 0, %s70
      %s72 = sphi 0, %s70
      %s73 = sphi 0, %s72
      %s87 = sphi 0, %s73
      %s91 = sphi 0, %s91
      %s93 = sphi 0, %s91
      %s94 = sphi 0, %s93
      %s108 = sphi 0, %s94
      %s112 = sphi 0, %s112
      %s114 = sphi 0, %s112
      %s115 = sphi 0, %s114
      %s129 = sphi 0, %s115
      %s133 = sphi 0, %s133
      %s135 = sphi 0, %s133
      %s136 = sphi 0, %s135
      %s150 = sphi 0, %s136
      %s156 = sphi 0, %s158
      %s159 = sphi 0, %s156
      %s160 = sphi 0, %s159
      %s176 = sphi 0, %s160
    $region4: #{tpu_custom_call.1} parent=1 // loop_header_branch
      %18 = sbr.rel (%p16) target = $region8
    $region5: #{tpu_custom_call.1} parent=1 // loop_body
      %s20 = ssub.s32 %s15, 1
      %s21 = ssub.s32 %s15, 2
      %s22 = sadd.s32 %s15, 1
      %s23 = ssub.s32 %s15, %s22
      %p24 = scmp.eq.s32.totalorder %s23, 0
      %s26 = sadd.s32 %s25, 1
      %s27 = scalar_select %p24, %s25, %s26
      %p30 = pneg %p24
      %p31 = scmp.eq.s32.totalorder %s15, 1
      %p32 = por %p30, %p31
      %p33 = scmp.ne.s32.totalorder %s25, %s28
      %p34 = scmp.eq.s32.totalorder %s15, 0
      %p35 = por %p33, %p34
      %p36 = scmp.ne.s32.totalorder %s25, %s28
      %p37 = scmp.eq.s32.totalorder %s20, 1
      %p38 = por %p36, %p37
      %p39 = scmp.ne.s32.totalorder %s28, %s29
      %p40 = scmp.eq.s32.totalorder %s20, 0
      %p41 = por %p39, %p40
      %p42 = scmp.ne.s32.totalorder %s28, %s29
      %p43 = scmp.eq.s32.totalorder %s21, 1
      %p44 = por %p42, %p43
      %p46 = scmp.ne.s32.totalorder %s29, %s45
      %p47 = scmp.eq.s32.totalorder %s21, 0
      %p48 = por %p46, %p47
      %s50 = sadd.s32 %s49, 1
      %p53 = scmp.eq.s32.totalorder %s15, 1
      %p54 = scmp.ne.s32.totalorder %s49, %s51
      %p55 = scmp.eq.s32.totalorder %s15, 0
      %p56 = por %p54, %p55
      %p57 = scmp.ne.s32.totalorder %s49, %s51
      %p58 = scmp.eq.s32.totalorder %s20, 1
      %p59 = por %p57, %p58
      %p60 = scmp.ne.s32.totalorder %s51, %s52
      %p61 = scmp.eq.s32.totalorder %s20, 0
      %p62 = por %p60, %p61
      %p63 = scmp.ne.s32.totalorder %s51, %s52
      %p64 = scmp.eq.s32.totalorder %s21, 1
      %p65 = por %p63, %p64
      %p67 = scmp.ne.s32.totalorder %s52, %s66
      %p68 = scmp.eq.s32.totalorder %s21, 0
      %p69 = por %p67, %p68
      %s71 = sadd.s32 %s70, 1
      %p74 = scmp.eq.s32.totalorder %s15, 1
      %p75 = scmp.ne.s32.totalorder %s70, %s72
      %p76 = scmp.eq.s32.totalorder %s15, 0
      %p77 = por %p75, %p76
      %p78 = scmp.ne.s32.totalorder %s70, %s72
      %p79 = scmp.eq.s32.totalorder %s20, 1
      %p80 = por %p78, %p79
      %p81 = scmp.ne.s32.totalorder %s72, %s73
      %p82 = scmp.eq.s32.totalorder %s20, 0
      %p83 = por %p81, %p82
      %p84 = scmp.ne.s32.totalorder %s72, %s73
      %p85 = scmp.eq.s32.totalorder %s21, 1
      %p86 = por %p84, %p85
      %p88 = scmp.ne.s32.totalorder %s73, %s87
      %p89 = scmp.eq.s32.totalorder %s21, 0
      %p90 = por %p88, %p89
      %s92 = sadd.s32 %s91, 1
      %p95 = scmp.eq.s32.totalorder %s15, 1
      %p96 = scmp.ne.s32.totalorder %s91, %s93
      %p97 = scmp.eq.s32.totalorder %s15, 0
      %p98 = por %p96, %p97
      %p99 = scmp.ne.s32.totalorder %s91, %s93
      %p100 = scmp.eq.s32.totalorder %s20, 1
      %p101 = por %p99, %p100
      %p102 = scmp.ne.s32.totalorder %s93, %s94
      %p103 = scmp.eq.s32.totalorder %s20, 0
      %p104 = por %p102, %p103
      %p105 = scmp.ne.s32.totalorder %s93, %s94
      %p106 = scmp.eq.s32.totalorder %s21, 1
      %p107 = por %p105, %p106
      %p109 = scmp.ne.s32.totalorder %s94, %s108
      %p110 = scmp.eq.s32.totalorder %s21, 0
      %p111 = por %p109, %p110
      %s113 = sadd.s32 %s112, 1
      %p116 = scmp.eq.s32.totalorder %s15, 1
      %p117 = scmp.ne.s32.totalorder %s112, %s114
      %p118 = scmp.eq.s32.totalorder %s15, 0
      %p119 = por %p117, %p118
      %p120 = scmp.ne.s32.totalorder %s112, %s114
      %p121 = scmp.eq.s32.totalorder %s20, 1
      %p122 = por %p120, %p121
      %p123 = scmp.ne.s32.totalorder %s114, %s115
      %p124 = scmp.eq.s32.totalorder %s20, 0
      %p125 = por %p123, %p124
      %p126 = scmp.ne.s32.totalorder %s114, %s115
      %p127 = scmp.eq.s32.totalorder %s21, 1
      %p128 = por %p126, %p127
      %p130 = scmp.ne.s32.totalorder %s115, %s129
      %p131 = scmp.eq.s32.totalorder %s21, 0
      %p132 = por %p130, %p131
      %s134 = sadd.s32 %s133, 1
      %p137 = scmp.eq.s32.totalorder %s15, 1
      %p138 = scmp.ne.s32.totalorder %s133, %s135
      %p139 = scmp.eq.s32.totalorder %s15, 0
      %p140 = por %p138, %p139
      %p141 = scmp.ne.s32.totalorder %s133, %s135
      %p142 = scmp.eq.s32.totalorder %s20, 1
      %p143 = por %p141, %p142
      %p144 = scmp.ne.s32.totalorder %s135, %s136
      %p145 = scmp.eq.s32.totalorder %s20, 0
      %p146 = por %p144, %p145
      %p147 = scmp.ne.s32.totalorder %s135, %s136
      %p148 = scmp.eq.s32.totalorder %s21, 1
      %p149 = por %p147, %p148
      %p151 = scmp.ne.s32.totalorder %s136, %s150
      %p152 = scmp.eq.s32.totalorder %s21, 0
      %p153 = por %p151, %p152
      %s154 = ssub.s32 %s15, %s22
      %p155 = scmp.eq.s32.totalorder %s154, 0
      %s157 = sadd.s32 %s156, 1
      %s158 = scalar_select %p155, %s156, %s157
      %p161 = pneg %p155
      %p162 = scmp.eq.s32.totalorder %s15, 1
      %p163 = por %p161, %p162
      %p164 = scmp.ne.s32.totalorder %s156, %s159
      %p165 = scmp.eq.s32.totalorder %s15, 0
      %p166 = por %p164, %p165
      %p167 = scmp.ne.s32.totalorder %s156, %s159
      %p168 = scmp.eq.s32.totalorder %s20, 1
      %p169 = por %p167, %p168
      %p170 = scmp.ne.s32.totalorder %s159, %s160
      %p171 = scmp.eq.s32.totalorder %s20, 0
      %p172 = por %p170, %p171
      %p173 = scmp.ne.s32.totalorder %s159, %s160
      %p174 = scmp.eq.s32.totalorder %s21, 1
      %p175 = por %p173, %p174
      %p177 = scmp.ne.s32.totalorder %s160, %s176
      %p178 = scmp.eq.s32.totalorder %s21, 0
      %p179 = por %p177, %p178
      %p180 = scmp.le.s32.totalorder 1, %s15
      %p181 = scmp.lt.s32.totalorder %s15, 3
      %p182 = pnand %p180, %p181
      %p183 = pneg %p182
      // Predicated region
      $region9: #{tpu_custom_call.1} parent=5 // pred_check
        _
      $region10: #{tpu_custom_call.1} parent=5 // pred_check_branch
        %185 = sbr.rel (%p182) target = $region12
      $region11: #{tpu_custom_call.1} parent=5 // pred_region
        %s186 = ssub.s32 %s15, 1
        // Predicated region
        $region13: #{tpu_custom_call.1} parent=11 // pred_check
          %p187 = pneg %p62
        $region14: #{tpu_custom_call.1} parent=11 // pred_check_branch
          %189 = sbr.rel (%p187) target = $region16
        $region15: #{tpu_custom_call.1} parent=11 // pred_region
          _
        $region16: #{tpu_custom_call.1} parent=11 // pred_fallthru
          _
        // Predicated region
        $region17: #{tpu_custom_call.1} parent=11 // pred_check
          %p190 = pneg %p83
        $region18: #{tpu_custom_call.1} parent=11 // pred_check_branch
          %192 = sbr.rel (%p190) target = $region20
        $region19: #{tpu_custom_call.1} parent=11 // pred_region
          _
        $region20: #{tpu_custom_call.1} parent=11 // pred_fallthru
          _
        // Predicated region
        $region21: #{tpu_custom_call.1} parent=11 // pred_check
          %p193 = pneg %p104
        $region22: #{tpu_custom_call.1} parent=11 // pred_check_branch
          %195 = sbr.rel (%p193) target = $region24
        $region23: #{tpu_custom_call.1} parent=11 // pred_region
          _
        $region24: #{tpu_custom_call.1} parent=11 // pred_fallthru
          _
        // Predicated region
        $region25: #{tpu_custom_call.1} parent=11 // pred_check
          %p196 = pneg %p125
        $region26: #{tpu_custom_call.1} parent=11 // pred_check_branch
          %198 = sbr.rel (%p196) target = $region28
        $region27: #{tpu_custom_call.1} parent=11 // pred_region
          _
        $region28: #{tpu_custom_call.1} parent=11 // pred_fallthru
          _
        // Predicated region
        $region29: #{tpu_custom_call.1} parent=11 // pred_check
          %p199 = pneg %p146
        $region30: #{tpu_custom_call.1} parent=11 // pred_check_branch
          %201 = sbr.rel (%p199) target = $region32
        $region31: #{tpu_custom_call.1} parent=11 // pred_region
          _
        $region32: #{tpu_custom_call.1} parent=11 // pred_fallthru
          _
      $region12: #{tpu_custom_call.1} parent=5 // pred_fallthru
        _
      %p202 = scmp.lt.s32.totalorder %s15, 2
      // Predicated region
      $region33: #{tpu_custom_call.1} parent=5 // pred_check
        %p203 = pneg %p202
      $region34: #{tpu_custom_call.1} parent=5 // pred_check_branch
        %205 = sbr.rel (%p203) target = $region36
      $region35: #{tpu_custom_call.1} parent=5 // pred_region
        // Predicated region
        $region37: #{tpu_custom_call.1} parent=35 // pred_check
          %p206 = pneg %p35
        $region38: #{tpu_custom_call.1} parent=35 // pred_check_branch
          %208 = sbr.rel (%p206) target = $region40
        $region39: #{tpu_custom_call.1} parent=35 // pred_region
          %p209 = scmp.lt.s32.totalorder %s15, 1
          %s210 = scalar_select %p209, %s15, 1
          %s211 = smul.addr %s210, 32
          %s212 = smul.addr %s211, 4
          %s213 = scalar_lea.vmem %s0, %s212
        $region40: #{tpu_custom_call.1} parent=35 // pred_fallthru
          _
      $region36: #{tpu_custom_call.1} parent=5 // pred_fallthru
        _
      %p214 = scmp.le.s32.totalorder 1, %s15
      %p215 = scmp.lt.s32.totalorder %s15, 3
      %p216 = pnand %p214, %p215
      %p217 = pneg %p216
      // Predicated region
      $region41: #{tpu_custom_call.1} parent=5 // pred_check
        _
      $region42: #{tpu_custom_call.1} parent=5 // pred_check_branch
        %219 = sbr.rel (%p216) target = $region44
      $region43: #{tpu_custom_call.1} parent=5 // pred_region
        %s220 = ssub.s32 %s15, 1
        %p221 = scmp.lt.s32.totalorder %s20, 1
        %s222 = scalar_select %p221, %s20, 1
        %s223 = smul.addr %s222, 32
        %s224 = smul.addr %s223, 4
        %s225 = scalar_lea.vmem %s0, %s224
        %p226 = pneg %p41
        %p227 = pneg %p38
        %p228 = pneg %p62
        %p229 = pneg %p59
        %p230 = pneg %p83
        %p231 = pneg %p80
        %p232 = pneg %p104
        %p233 = pneg %p101
        %p234 = pneg %p125
        %p235 = pneg %p122
        %p236 = pneg %p146
        %p237 = pneg %p143
        %p238 = pneg %p172
        %p239 = pneg %p169
        %s240 = sand.u32 %s159, 1
        %s241 = scalar_lea.sflag [#allocation3], %s240
        %s242 = sand.u32 %s159, 1
        %s243 = smul.addr %s242, 256
        %s244 = scalar_lea.vmem [#allocation2], %s243
        %p245 = scmp.lt.s32.totalorder %s20, 1
        %s246 = scalar_select %p245, %s20, 1
        %s247 = smul.addr %s246, 32
        %s248 = smul.addr %s247, 4
        %s249 = scalar_lea.vmem %s0, %s248
        %v251 = vld [vmem:[%s249] sm:$0xf]
        %v252 = vld [vmem:[%s249 + $0x4] sm:$0xf]
        %v253 = vld [vmem:[%s249 + $0x8] sm:$0xf]
        %v254 = vld [vmem:[%s249 + $0xc] sm:$0xf]
        %v255 = vld [vmem:[%s249 + $0x10] sm:$0xf]
        %v256 = vld [vmem:[%s249 + $0x14] sm:$0xf]
        %v257 = vld [vmem:[%s249 + $0x18] sm:$0xf]
        %v258 = vld [vmem:[%s249 + $0x1c] sm:$0xf]
        %v259 = vld [vmem:[%s249 + $0x20] sm:$0xf]
        %v260 = vld [vmem:[%s249 + $0x24] sm:$0xf]
        %v261 = vld [vmem:[%s249 + $0x28] sm:$0xf]
        %v262 = vld [vmem:[%s249 + $0x2c] sm:$0xf]
        %v263 = vld [vmem:[%s249 + $0x30] sm:$0xf]
        %v264 = vld [vmem:[%s249 + $0x34] sm:$0xf]
        %v265 = vld [vmem:[%s249 + $0x38] sm:$0xf]
        %v266 = vld [vmem:[%s249 + $0x3c] sm:$0xf]
        %v267 = vld [vmem:[%s249 + $0x40] sm:$0xf]
        %v268 = vld [vmem:[%s249 + $0x44] sm:$0xf]
        %v269 = vld [vmem:[%s249 + $0x48] sm:$0xf]
        %v270 = vld [vmem:[%s249 + $0x4c] sm:$0xf]
        %v271 = vld [vmem:[%s249 + $0x50] sm:$0xf]
        %v272 = vld [vmem:[%s249 + $0x54] sm:$0xf]
        %v273 = vld [vmem:[%s249 + $0x58] sm:$0xf]
        %v274 = vld [vmem:[%s249 + $0x5c] sm:$0xf]
        %v275 = vld [vmem:[%s249 + $0x60] sm:$0xf]
        %v276 = vld [vmem:[%s249 + $0x64] sm:$0xf]
        %v277 = vld [vmem:[%s249 + $0x68] sm:$0xf]
        %v278 = vld [vmem:[%s249 + $0x6c] sm:$0xf]
        %v279 = vld [vmem:[%s249 + $0x70] sm:$0xf]
        %v280 = vld [vmem:[%s249 + $0x74] sm:$0xf]
        %v281 = vld [vmem:[%s249 + $0x78] sm:$0xf]
        %v282 = vld [vmem:[%s249 + $0x7c] sm:$0xf]
        %v283 = vld [vmem:[%s1] sm:$0xf]
        %v284 = vld [vmem:[%s1 + $0x4] sm:$0xf]
        %v285 = vld [vmem:[%s1 + $0x8] sm:$0xf]
        %v286 = vld [vmem:[%s1 + $0xc] sm:$0xf]
        %v287 = vld [vmem:[%s1 + $0x10] sm:$0x3]
        %v320 = vunpack.c.l.b16 %v251
        %v321 = vunpack.c.l.b16 %v252
        %v322 = vunpack.c.l.b16 %v253
        %v323 = vunpack.c.l.b16 %v254
        %v324 = vunpack.c.l.b16 %v255
        %v325 = vunpack.c.l.b16 %v256
        %v326 = vunpack.c.l.b16 %v257
        %v327 = vunpack.c.l.b16 %v258
        %v328 = vunpack.c.l.b16 %v259
        %v329 = vunpack.c.l.b16 %v260
        %v330 = vunpack.c.l.b16 %v261
        %v331 = vunpack.c.l.b16 %v262
        %v332 = vunpack.c.l.b16 %v263
        %v333 = vunpack.c.l.b16 %v264
        %v334 = vunpack.c.l.b16 %v265
        %v335 = vunpack.c.l.b16 %v266
        %v336 = vunpack.c.l.b16 %v267
        %v337 = vunpack.c.l.b16 %v268
        %v338 = vunpack.c.l.b16 %v269
        %v339 = vunpack.c.l.b16 %v270
        %v340 = vunpack.c.l.b16 %v271
        %v341 = vunpack.c.l.b16 %v272
        %v342 = vunpack.c.l.b16 %v273
        %v343 = vunpack.c.l.b16 %v274
        %v344 = vunpack.c.l.b16 %v275
        %v345 = vunpack.c.l.b16 %v276
        %v346 = vunpack.c.l.b16 %v277
        %v347 = vunpack.c.l.b16 %v278
        %v348 = vunpack.c.l.b16 %v279
        %v349 = vunpack.c.l.b16 %v280
        %v350 = vunpack.c.l.b16 %v281
        %v351 = vunpack.c.l.b16 %v282
        %v352 = vpack.c.b16 %v321, %v320
        %v353 = vpack.c.b16 %v323, %v322
        %v354 = vpack.c.b16 %v325, %v324
        %v355 = vpack.c.b16 %v327, %v326
        %v356 = vpack.c.b16 %v329, %v328
        %v357 = vpack.c.b16 %v331, %v330
        %v358 = vpack.c.b16 %v333, %v332
        %v359 = vpack.c.b16 %v335, %v334
        %v360 = vpack.c.b16 %v337, %v336
        %v361 = vpack.c.b16 %v339, %v338
        %v362 = vpack.c.b16 %v341, %v340
        %v363 = vpack.c.b16 %v343, %v342
        %v364 = vpack.c.b16 %v345, %v344
        %v365 = vpack.c.b16 %v347, %v346
        %v366 = vpack.c.b16 %v349, %v348
        %v367 = vpack.c.b16 %v351, %v350
        %v373 = vunpack.c.l.b16 %v283
        %v374 = vunpack.c.l.b16 %v284
        %v375 = vunpack.c.l.b16 %v285
        %v376 = vunpack.c.l.b16 %v286
        %v377 = vunpack.c.l.b16 %v287
        %v378 = vpack.c.b16 %v374, %v373
        %v379 = vpack.c.b16 %v376, %v375
        %v380 = vpack.c.b16 %v377, %v377
        %vm383 = vcmask 293888
        %v385 = vsel %vm383, %v352, 0
        %v388 = vsel %vm383, %v353, 0
        %v391 = vsel %vm383, %v354, 0
        %v394 = vsel %vm383, %v355, 0
        %v397 = vsel %vm383, %v356, 0
        %v400 = vsel %vm383, %v357, 0
        %v403 = vsel %vm383, %v358, 0
        %v406 = vsel %vm383, %v359, 0
        %v409 = vsel %vm383, %v360, 0
        %v412 = vsel %vm383, %v361, 0
        %v415 = vsel %vm383, %v362, 0
        %v418 = vsel %vm383, %v363, 0
        %v421 = vsel %vm383, %v364, 0
        %v424 = vsel %vm383, %v365, 0
        %v427 = vsel %vm383, %v366, 0
        %v430 = vsel %vm383, %v367, 0
        %vm432 = vcmask 1041408
        %v434 = vsel %vm432, %v380, 0
        %436 = vmatpush.bf16.msra.mxu0 0
        %437 = vmatpush.bf16.msra.mxu0 0
        %438 = vmatpush.bf16.msra.mxu0 0
        %439 = vmatpush.bf16.msra.mxu0 0
        %440 = vmatpush.bf16.msra.mxu0 0
        %441 = vmatpush.bf16.msra.mxu0 %v434
        %442 = vmatpush.bf16.msra.mxu0 %v379
        %443 = vmatpush.bf16.msra.mxu0 %v378
        %444 = vmatmul.bf16.gmra.mxu0 %v385
        %v445 = vpop.f32.mrf.mxu0
        %v446 = vadd.f32 0.0, %v445
        %v447 = vpop.f32.mrf.mxu0
        %v448 = vadd.f32 0.0, %v447
        %449 = vmatmul.bf16.gmra.mxu0 %v388
        %v450 = vpop.f32.mrf.mxu0
        %v451 = vadd.f32 0.0, %v450
        %v452 = vpop.f32.mrf.mxu0
        %v453 = vadd.f32 0.0, %v452
        %454 = vmatmul.bf16.gmra.mxu0 %v391
        %v455 = vpop.f32.mrf.mxu0
        %v456 = vadd.f32 0.0, %v455
        %v457 = vpop.f32.mrf.mxu0
        %v458 = vadd.f32 0.0, %v457
        %459 = vmatmul.bf16.gmra.mxu0 %v394
        %v460 = vpop.f32.mrf.mxu0
        %v461 = vadd.f32 0.0, %v460
        %v462 = vpop.f32.mrf.mxu0
        %v463 = vadd.f32 0.0, %v462
        %464 = vmatmul.bf16.gmra.mxu0 %v397
        %v465 = vpop.f32.mrf.mxu0
        %v466 = vadd.f32 0.0, %v465
        %v467 = vpop.f32.mrf.mxu0
        %v468 = vadd.f32 0.0, %v467
        %469 = vmatmul.bf16.gmra.mxu0 %v400
        %v470 = vpop.f32.mrf.mxu0
        %v471 = vadd.f32 0.0, %v470
        %v472 = vpop.f32.mrf.mxu0
        %v473 = vadd.f32 0.0, %v472
        %474 = vmatmul.bf16.gmra.mxu0 %v403
        %v475 = vpop.f32.mrf.mxu0
        %v476 = vadd.f32 0.0, %v475
        %v477 = vpop.f32.mrf.mxu0
        %v478 = vadd.f32 0.0, %v477
        %479 = vmatmul.bf16.gmra.mxu0 %v406
        %v480 = vpop.f32.mrf.mxu0
        %v481 = vadd.f32 0.0, %v480
        %v482 = vpop.f32.mrf.mxu0
        %v483 = vadd.f32 0.0, %v482
        %484 = vmatmul.bf16.gmra.mxu0 %v409
        %v485 = vpop.f32.mrf.mxu0
        %v486 = vadd.f32 0.0, %v485
        %v487 = vpop.f32.mrf.mxu0
        %v488 = vadd.f32 0.0, %v487
        %489 = vmatmul.bf16.gmra.mxu0 %v412
        %v490 = vpop.f32.mrf.mxu0
        %v491 = vadd.f32 0.0, %v490
        %v492 = vpop.f32.mrf.mxu0
        %v493 = vadd.f32 0.0, %v492
        %494 = vmatmul.bf16.gmra.mxu0 %v415
        %v495 = vpop.f32.mrf.mxu0
        %v496 = vadd.f32 0.0, %v495
        %v497 = vpop.f32.mrf.mxu0
        %v498 = vadd.f32 0.0, %v497
        %499 = vmatmul.bf16.gmra.mxu0 %v418
        %v500 = vpop.f32.mrf.mxu0
        %v501 = vadd.f32 0.0, %v500
        %v502 = vpop.f32.mrf.mxu0
        %v503 = vadd.f32 0.0, %v502
        %504 = vmatmul.bf16.gmra.mxu0 %v421
        %v505 = vpop.f32.mrf.mxu0
        %v506 = vadd.f32 0.0, %v505
        %v507 = vpop.f32.mrf.mxu0
        %v508 = vadd.f32 0.0, %v507
        %509 = vmatmul.bf16.gmra.mxu0 %v424
        %v510 = vpop.f32.mrf.mxu0
        %v511 = vadd.f32 0.0, %v510
        %v512 = vpop.f32.mrf.mxu0
        %v513 = vadd.f32 0.0, %v512
        %514 = vmatmul.bf16.gmra.mxu0 %v427
        %v515 = vpop.f32.mrf.mxu0
        %v516 = vadd.f32 0.0, %v515
        %v517 = vpop.f32.mrf.mxu0
        %v518 = vadd.f32 0.0, %v517
        %519 = vmatmul.bf16.gmra.mxu0 %v430
        %v520 = vpop.f32.mrf.mxu0
        %v521 = vadd.f32 0.0, %v520
        %v522 = vpop.f32.mrf.mxu0
        %v523 = vadd.f32 0.0, %v522
        %524 = vdwg.mxu0
        %v525 = vadd.f32 %v446, %v448
        %v526 = vadd.f32 %v525, %v451
        %v527 = vadd.f32 %v526, %v453
        %v528 = vadd.f32 %v527, %v456
        %v529 = vadd.f32 %v528, %v458
        %v530 = vadd.f32 %v529, %v461
        %v531 = vadd.f32 %v530, %v463
        %v532 = vadd.f32 %v531, %v466
        %v533 = vadd.f32 %v532, %v468
        %v534 = vadd.f32 %v533, %v471
        %v535 = vadd.f32 %v534, %v473
        %v536 = vadd.f32 %v535, %v476
        %v537 = vadd.f32 %v536, %v478
        %v538 = vadd.f32 %v537, %v481
        %v539 = vadd.f32 %v538, %v483
        %v540 = vadd.f32 %v539, %v486
        %v541 = vadd.f32 %v540, %v488
        %v542 = vadd.f32 %v541, %v491
        %v543 = vadd.f32 %v542, %v493
        %v544 = vadd.f32 %v543, %v496
        %v545 = vadd.f32 %v544, %v498
        %v546 = vadd.f32 %v545, %v501
        %v547 = vadd.f32 %v546, %v503
        %v548 = vadd.f32 %v547, %v506
        %v549 = vadd.f32 %v548, %v508
        %v550 = vadd.f32 %v549, %v511
        %v551 = vadd.f32 %v550, %v513
        %v552 = vadd.f32 %v551, %v516
        %v553 = vadd.f32 %v552, %v518
        %v554 = vadd.f32 %v553, %v521
        %v555 = vadd.f32 %v554, %v523
        %v556 = vrot.slane %v555, 4
        %v557 = vadd.f32 %v555, %v556
        %v558 = vrot.slane %v557, 2
        %v559 = vadd.f32 %v557, %v558
        %v560 = vrot.slane %v559, 1
        %v561 = vadd.f32 %v559, %v560
        %v562 = vmul.f32 %v446, %v446
        %v563 = vmul.f32 %v448, %v448
        %v564 = vmul.f32 %v451, %v451
        %v565 = vmul.f32 %v453, %v453
        %v566 = vmul.f32 %v456, %v456
        %v567 = vmul.f32 %v458, %v458
        %v568 = vmul.f32 %v461, %v461
        %v569 = vmul.f32 %v463, %v463
        %v570 = vmul.f32 %v466, %v466
        %v571 = vmul.f32 %v468, %v468
        %v572 = vmul.f32 %v471, %v471
        %v573 = vmul.f32 %v473, %v473
        %v574 = vmul.f32 %v476, %v476
        %v575 = vmul.f32 %v478, %v478
        %v576 = vmul.f32 %v481, %v481
        %v577 = vmul.f32 %v483, %v483
        %v578 = vmul.f32 %v486, %v486
        %v579 = vmul.f32 %v488, %v488
        %v580 = vmul.f32 %v491, %v491
        %v581 = vmul.f32 %v493, %v493
        %v582 = vmul.f32 %v496, %v496
        %v583 = vmul.f32 %v498, %v498
        %v584 = vmul.f32 %v501, %v501
        %v585 = vmul.f32 %v503, %v503
        %v586 = vmul.f32 %v506, %v506
        %v587 = vmul.f32 %v508, %v508
        %v588 = vmul.f32 %v511, %v511
        %v589 = vmul.f32 %v513, %v513
        %v590 = vmul.f32 %v516, %v516
        %v591 = vmul.f32 %v518, %v518
        %v592 = vmul.f32 %v521, %v521
        %v593 = vmul.f32 %v523, %v523
        %v594 = vadd.f32 %v562, %v563
        %v595 = vadd.f32 %v594, %v564
        %v596 = vadd.f32 %v595, %v565
        %v597 = vadd.f32 %v596, %v566
        %v598 = vadd.f32 %v597, %v567
        %v599 = vadd.f32 %v598, %v568
        %v600 = vadd.f32 %v599, %v569
        %v601 = vadd.f32 %v600, %v570
        %v602 = vadd.f32 %v601, %v571
        %v603 = vadd.f32 %v602, %v572
        %v604 = vadd.f32 %v603, %v573
        %v605 = vadd.f32 %v604, %v574
        %v606 = vadd.f32 %v605, %v575
        %v607 = vadd.f32 %v606, %v576
        %v608 = vadd.f32 %v607, %v577
        %v609 = vadd.f32 %v608, %v578
        %v610 = vadd.f32 %v609, %v579
        %v611 = vadd.f32 %v610, %v580
        %v612 = vadd.f32 %v611, %v581
        %v613 = vadd.f32 %v612, %v582
        %v614 = vadd.f32 %v613, %v583
        %v615 = vadd.f32 %v614, %v584
        %v616 = vadd.f32 %v615, %v585
        %v617 = vadd.f32 %v616, %v586
        %v618 = vadd.f32 %v617, %v587
        %v619 = vadd.f32 %v618, %v588
        %v620 = vadd.f32 %v619, %v589
        %v621 = vadd.f32 %v620, %v590
        %v622 = vadd.f32 %v621, %v591
        %v623 = vadd.f32 %v622, %v592
        %v624 = vadd.f32 %v623, %v593
        %v625 = vrot.slane %v624, 4
        %v626 = vadd.f32 %v624, %v625
        %v627 = vrot.slane %v626, 2
        %v628 = vadd.f32 %v626, %v627
        %v629 = vrot.slane %v628, 1
        %v630 = vadd.f32 %v628, %v629
        %vm631 = vcmask 1040384
        %v632 = vsel %vm631, %v561, %v630
        %v633 = vld [vmem:[%s4] sm:$0xff]
        %v634 = vld [vmem:[%s4 + $0x8] sm:$0xff]
        %v635 = vld [vmem:[%s4 + $0x10] sm:$0xff]
        %v636 = vld [vmem:[%s4 + $0x18] sm:$0xff]
        %v637 = vld [vmem:[%s4 + $0x20] sm:$0xff]
        %v638 = vld [vmem:[%s4 + $0x28] sm:$0xff]
        %v639 = vld [vmem:[%s4 + $0x30] sm:$0xff]
        %v640 = vld [vmem:[%s4 + $0x38] sm:$0xff]
        %v641 = vld [vmem:[%s4 + $0x40] sm:$0xff]
        %v642 = vld [vmem:[%s4 + $0x48] sm:$0xff]
        %v643 = vld [vmem:[%s4 + $0x50] sm:$0xff]
        %v644 = vld [vmem:[%s4 + $0x58] sm:$0xff]
        %v645 = vld [vmem:[%s4 + $0x60] sm:$0xff]
        %v646 = vld [vmem:[%s4 + $0x68] sm:$0xff]
        %v647 = vld [vmem:[%s4 + $0x70] sm:$0xff]
        %v648 = vld [vmem:[%s4 + $0x78] sm:$0xff]
        %649 = vmatpush.msra.mxu0 %v648
        %650 = vmatpush.msra.mxu0 %v647
        %651 = vmatpush.msra.mxu0 %v646
        %652 = vmatpush.msra.mxu0 %v645
        %653 = vmatpush.msra.mxu0 %v644
        %654 = vmatpush.msra.mxu0 %v643
        %655 = vmatpush.msra.mxu0 %v642
        %656 = vmatpush.msra.mxu0 %v641
        %657 = vmatpush.msra.mxu0 %v640
        %658 = vmatpush.msra.mxu0 %v639
        %659 = vmatpush.msra.mxu0 %v638
        %660 = vmatpush.msra.mxu0 %v637
        %661 = vmatpush.msra.mxu0 %v636
        %662 = vmatpush.msra.mxu0 %v635
        %663 = vmatpush.msra.mxu0 %v634
        %664 = vmatpush.msra.mxu0 %v633
        %665 = vmatmul.f32.gmra.mxu0 %v632
        %v666 = vpop.f32.mrf.mxu0
        %v667 = vadd.f32 0.0, %v666
        %668 = vdwg.mxu0
        %v669 = vmul.f32 %v667, 0.0009765625
        %v670 = vmul.f32 %v669, %v669
        %v672 = vrot.slane %v670, 7
        %v674 = vsub.f32 %v669, %v672
        %v675 = vadd.f32 %v674, 1e-05
        %v676 = vrsqrt.pop %v675
        %v677 = vmul.f32 %v676, %v675
        %v678 = vmul.f32 %v677, %v676
        %v679 = vmul.f32 0.5, %v678
        %v680 = vsub.f32 1.5, %v679
        %v681 = vmul.f32 %v676, %v680
        %vm682 = vweird.f32 %v675
        %vm683 = vweird.f32 %v676
        %vm684 = vmor %vm682, %vm683
        %v685 = vsel %vm684, %v676, %v681
        %v686 = vsel %vm631, %v669, %v685
        %v687 = vld [vmem:[%s5] sm:$0xff]
        %v688 = vld [vmem:[%s5 + $0x8] sm:$0xff]
        %v689 = vld [vmem:[%s5 + $0x10] sm:$0xff]
        %v690 = vld [vmem:[%s5 + $0x18] sm:$0xff]
        %vm691 = vcmask 261120
        %v693 = vsel %vm691, %v686, 0
        %695 = vmatpush.msra.mxu0 0.0
        %696 = vmatpush.msra.mxu0 0.0
        %697 = vmatpush.msra.mxu0 0.0
        %698 = vmatpush.msra.mxu0 0.0
        %699 = vmatpush.msra.mxu0 0.0
        %700 = vmatpush.msra.mxu0 0.0
        %701 = vmatpush.msra.mxu0 0.0
        %702 = vmatpush.msra.mxu0 0.0
        %703 = vmatpush.msra.mxu0 0.0
        %704 = vmatpush.msra.mxu0 0.0
        %705 = vmatpush.msra.mxu0 0.0
        %706 = vmatpush.msra.mxu0 0.0
        %707 = vmatpush.msra.mxu0 %v690
        %708 = vmatpush.msra.mxu0 %v689
        %709 = vmatpush.msra.mxu0 %v688
        %710 = vmatpush.msra.mxu0 %v687
        %711 = vmatmul.f32.gmra.mxu0 %v693
        %v712 = vpop.f32.mrf.mxu0
        %v713 = vadd.f32 0.0, %v712
        %714 = vdwg.mxu0
        %v715 = vld [vmem:[%s2] sm:$0x1]
        %v717 = vperm.slane %v715, 0
        %v719 = vmul.f32 %v713, %v717
        %v720 = vld [vmem:[%s3] sm:$0x1]
        %v722 = vrot.slane %v719, 1
        %v724 = vmul.f32 %v713, %v722
        %v725 = vsub.f32 %v720, %v724
        %v726 = vperm.slane %v719, 1
        %v727 = vmul.f32 %v446, %v726
        %v728 = vmul.f32 %v448, %v726
        %v729 = vmul.f32 %v451, %v726
        %v730 = vmul.f32 %v453, %v726
        %v731 = vmul.f32 %v456, %v726
        %v732 = vmul.f32 %v458, %v726
        %v733 = vmul.f32 %v461, %v726
        %v734 = vmul.f32 %v463, %v726
        %v735 = vmul.f32 %v466, %v726
        %v736 = vmul.f32 %v468, %v726
        %v737 = vmul.f32 %v471, %v726
        %v738 = vmul.f32 %v473, %v726
        %v739 = vmul.f32 %v476, %v726
        %v740 = vmul.f32 %v478, %v726
        %v741 = vmul.f32 %v481, %v726
        %v742 = vmul.f32 %v483, %v726
        %v743 = vmul.f32 %v486, %v726
        %v744 = vmul.f32 %v488, %v726
        %v745 = vmul.f32 %v491, %v726
        %v746 = vmul.f32 %v493, %v726
        %v747 = vmul.f32 %v496, %v726
        %v748 = vmul.f32 %v498, %v726
        %v749 = vmul.f32 %v501, %v726
        %v750 = vmul.f32 %v503, %v726
        %v751 = vmul.f32 %v506, %v726
        %v752 = vmul.f32 %v508, %v726
        %v753 = vmul.f32 %v511, %v726
        %v754 = vmul.f32 %v513, %v726
        %v755 = vmul.f32 %v516, %v726
        %v756 = vmul.f32 %v518, %v726
        %v757 = vmul.f32 %v521, %v726
        %v758 = vmul.f32 %v523, %v726
        %v760 = vperm.slane %v725, 0
        %v762 = vadd.f32 %v727, %v760
        %v763 = vadd.f32 %v728, %v760
        %v764 = vadd.f32 %v729, %v760
        %v765 = vadd.f32 %v730, %v760
        %v766 = vadd.f32 %v731, %v760
        %v767 = vadd.f32 %v732, %v760
        %v768 = vadd.f32 %v733, %v760
        %v769 = vadd.f32 %v734, %v760
        %v770 = vadd.f32 %v735, %v760
        %v771 = vadd.f32 %v736, %v760
        %v772 = vadd.f32 %v737, %v760
        %v773 = vadd.f32 %v738, %v760
        %v774 = vadd.f32 %v739, %v760
        %v775 = vadd.f32 %v740, %v760
        %v776 = vadd.f32 %v741, %v760
        %v777 = vadd.f32 %v742, %v760
        %v778 = vadd.f32 %v743, %v760
        %v779 = vadd.f32 %v744, %v760
        %v780 = vadd.f32 %v745, %v760
        %v781 = vadd.f32 %v746, %v760
        %v782 = vadd.f32 %v747, %v760
        %v783 = vadd.f32 %v748, %v760
        %v784 = vadd.f32 %v749, %v760
        %v785 = vadd.f32 %v750, %v760
        %v786 = vadd.f32 %v751, %v760
        %v787 = vadd.f32 %v752, %v760
        %v788 = vadd.f32 %v753, %v760
        %v789 = vadd.f32 %v754, %v760
        %v790 = vadd.f32 %v755, %v760
        %v791 = vadd.f32 %v756, %v760
        %v792 = vadd.f32 %v757, %v760
        %v793 = vadd.f32 %v758, %v760
        %v794 = vmax.f32 %v762, 0.0
        %v795 = vmax.f32 %v763, 0.0
        %v796 = vmax.f32 %v764, 0.0
        %v797 = vmax.f32 %v765, 0.0
        %v798 = vmax.f32 %v766, 0.0
        %v799 = vmax.f32 %v767, 0.0
        %v800 = vmax.f32 %v768, 0.0
        %v801 = vmax.f32 %v769, 0.0
        %v802 = vmax.f32 %v770, 0.0
        %v803 = vmax.f32 %v771, 0.0
        %v804 = vmax.f32 %v772, 0.0
        %v805 = vmax.f32 %v773, 0.0
        %v806 = vmax.f32 %v774, 0.0
        %v807 = vmax.f32 %v775, 0.0
        %v808 = vmax.f32 %v776, 0.0
        %v809 = vmax.f32 %v777, 0.0
        %v810 = vmax.f32 %v778, 0.0
        %v811 = vmax.f32 %v779, 0.0
        %v812 = vmax.f32 %v780, 0.0
        %v813 = vmax.f32 %v781, 0.0
        %v814 = vmax.f32 %v782, 0.0
        %v815 = vmax.f32 %v783, 0.0
        %v816 = vmax.f32 %v784, 0.0
        %v817 = vmax.f32 %v785, 0.0
        %v818 = vmax.f32 %v786, 0.0
        %v819 = vmax.f32 %v787, 0.0
        %v820 = vmax.f32 %v788, 0.0
        %v821 = vmax.f32 %v789, 0.0
        %v822 = vmax.f32 %v790, 0.0
        %v823 = vmax.f32 %v791, 0.0
        %v824 = vmax.f32 %v792, 0.0
        %v825 = vmax.f32 %v793, 0.0
        %826 = vst [vmem:[%s244] sm:$0xff] %v794
        %827 = vst [vmem:[%s244 + $0x8] sm:$0xff] %v795
        %828 = vst [vmem:[%s244 + $0x10] sm:$0xff] %v796
        %829 = vst [vmem:[%s244 + $0x18] sm:$0xff] %v797
        %830 = vst [vmem:[%s244 + $0x20] sm:$0xff] %v798
        %831 = vst [vmem:[%s244 + $0x28] sm:$0xff] %v799
        %832 = vst [vmem:[%s244 + $0x30] sm:$0xff] %v800
        %833 = vst [vmem:[%s244 + $0x38] sm:$0xff] %v801
        %834 = vst [vmem:[%s244 + $0x40] sm:$0xff] %v802
        %835 = vst [vmem:[%s244 + $0x48] sm:$0xff] %v803
        %836 = vst [vmem:[%s244 + $0x50] sm:$0xff] %v804
        %837 = vst [vmem:[%s244 + $0x58] sm:$0xff] %v805
        %838 = vst [vmem:[%s244 + $0x60] sm:$0xff] %v806
        %839 = vst [vmem:[%s244 + $0x68] sm:$0xff] %v807
        %840 = vst [vmem:[%s244 + $0x70] sm:$0xff] %v808
        %841 = vst [vmem:[%s244 + $0x78] sm:$0xff] %v809
        %842 = vst [vmem:[%s244 + $0x80] sm:$0xff] %v810
        %843 = vst [vmem:[%s244 + $0x88] sm:$0xff] %v811
        %844 = vst [vmem:[%s244 + $0x90] sm:$0xff] %v812
        %845 = vst [vmem:[%s244 + $0x98] sm:$0xff] %v813
        %846 = vst [vmem:[%s244 + $0xa0] sm:$0xff] %v814
        %847 = vst [vmem:[%s244 + $0xa8] sm:$0xff] %v815
        %848 = vst [vmem:[%s244 + $0xb0] sm:$0xff] %v816
        %849 = vst [vmem:[%s244 + $0xb8] sm:$0xff] %v817
        %850 = vst [vmem:[%s244 + $0xc0] sm:$0xff] %v818
        %851 = vst [vmem:[%s244 + $0xc8] sm:$0xff] %v819
        %852 = vst [vmem:[%s244 + $0xd0] sm:$0xff] %v820
        %853 = vst [vmem:[%s244 + $0xd8] sm:$0xff] %v821
        %854 = vst [vmem:[%s244 + $0xe0] sm:$0xff] %v822
        %855 = vst [vmem:[%s244 + $0xe8] sm:$0xff] %v823
        %856 = vst [vmem:[%s244 + $0xf0] sm:$0xff] %v824
        %857 = vst [vmem:[%s244 + $0xf8] sm:$0xff] %v825
        %s858 = sand.u32 %s159, 1
        %s859 = scalar_lea.sflag [#allocation3], %s858
        %s860 = sand.u32 %s159, 1
        %s861 = smul.addr %s860, 256
        %s862 = scalar_lea.vmem [#allocation2], %s861
        // Predicated region
        $region45: #{tpu_custom_call.1} parent=43 // pred_check
          %p863 = pneg %p169
        $region46: #{tpu_custom_call.1} parent=43 // pred_check_branch
          %865 = sbr.rel (%p863) target = $region48
        $region47: #{tpu_custom_call.1} parent=43 // pred_region
          %867 = vsyncadd %s859, 0
          %s868 = smul.addr %s20, 32
          %s869 = smul.addr %s868, 8
          %s870 = scalar_lea.hbm %s6, %s869
          %s871 = sshll.u32 %s862, 4
          %s872 = int_to_ptr.vmem [resolvable:$true] %s871
          %s873 = sshll.u32 %s870, 4
          %s874 = int_to_ptr.hbm [resolvable:$true] %s873
          %879 = dma.vmem_to_hbm [thread:$0]  %s872, 4096, %s874, %s859, 128, 128, 8
        $region48: #{tpu_custom_call.1} parent=43 // pred_fallthru
          _
      $region44: #{tpu_custom_call.1} parent=5 // pred_fallthru
        _
      %p880 = scmp.le.s32.totalorder 2, %s15
      // Predicated region
      $region49: #{tpu_custom_call.1} parent=5 // pred_check
        %p881 = pneg %p880
      $region50: #{tpu_custom_call.1} parent=5 // pred_check_branch
        %883 = sbr.rel (%p881) target = $region52
      $region51: #{tpu_custom_call.1} parent=5 // pred_region
        %s884 = ssub.s32 %s15, 2
        // Predicated region
        $region53: #{tpu_custom_call.1} parent=51 // pred_check
          %p885 = pneg %p175
        $region54: #{tpu_custom_call.1} parent=51 // pred_check_branch
          %887 = sbr.rel (%p885) target = $region56
        $region55: #{tpu_custom_call.1} parent=51 // pred_region
          %s888 = sand.u32 %s160, 1
          %s889 = scalar_lea.sflag [#allocation3], %s888
          %s890 = sand.u32 %s160, 1
          %s891 = smul.addr %s890, 256
          %s892 = scalar_lea.vmem [#allocation2], %s891
          %894 = dma.done %s889, 4096
        $region56: #{tpu_custom_call.1} parent=51 // pred_fallthru
          _
      $region52: #{tpu_custom_call.1} parent=5 // pred_fallthru
        _
    $region6: #{tpu_custom_call.1} parent=1 // loop_footer
      %s19 = sadd.s32 1, %s15
    $region7: #{tpu_custom_call.1} parent=1 // loop_footer_branch
      %14 = sbr.rel target = $region3
    $region8: #{tpu_custom_call.1} parent=1 // loop_exit
      _
    %895 = vsyncpa [#allocation3], 1
    %s896 = scalar_lea.sflag [#allocation3], 1
    %897 = vsyncpa %s896, 1

</llo_original>
